<compile_context>
chip_gen: v5e
topology: v5e:2x2
jax: 0.10.0
libtpu: 0.0.40
codegen_flags: <defaults>
</compile_context>

<pallas_src>
import math

import jax
import jax.numpy as jnp
from jax.scipy.special import erf as _erf_exact
from jax.experimental import pallas as pl
from jax.experimental.pallas import tpu as pltpu


# ----------------------------- shared math helpers ---------------------------------------

def _layernorm(x, gamma, beta, eps=1e-12):
    u = jnp.mean(x, axis=-1, keepdims=True)
    d = x - u
    s = jnp.mean(d * d, axis=-1, keepdims=True)
    return gamma * (d * jax.lax.rsqrt(s + eps)) + beta


def _erf_poly(x):
    # Abramowitz & Stegun 7.1.26, max abs error ~1.5e-7.  Elementary ops only so it is
    # guaranteed to lower inside the Pallas kernel.
    a1, a2, a3, a4, a5 = 0.254829592, -0.284496736, 1.421413741, -1.453152027, 1.061405429
    pp = 0.3275911
    sgn = jnp.where(x < 0.0, -1.0, 1.0)
    ax = jnp.abs(x)
    t = 1.0 / (1.0 + pp * ax)
    poly = ((((a5 * t + a4) * t + a3) * t + a2) * t + a1) * t
    return sgn * (1.0 - poly * jnp.exp(-ax * ax))


def _gelu_kernel(x):
    return x * 0.5 * (1.0 + _erf_poly(x * (1.0 / math.sqrt(2.0))))


def _gelu_ref(x):
    return x * 0.5 * (1.0 + _erf_exact(x / math.sqrt(2.0)))


# ----------------------------- Pallas kernel ---------------------------------------------

def make_bert_layer_kernel(*, batch, seq, dim, inter, heads, has_mask, mxu_dtype):
    bb, S, D, I, H = batch, seq, dim, inter, heads
    hs = D // H
    scale = 1.0 / math.sqrt(hs)
    # row offsets inside the packed weight slab: [xt_w | ao_w | iw | ow]
    O_XT, O_AO, O_IW, O_OW = 0, D, 2 * D, 3 * D

    def kernel(*refs):
        if has_mask:
            x_ref, mask_ref, w_ref, v_ref, out_ref = refs
        else:
            x_ref, w_ref, v_ref, out_ref = refs
            mask_ref = None

        # ---- lane-dense input block (bb, S*D) -> token-major (bb*S, D) --------------
        x2 = x_ref[...]
        x3 = jnp.concatenate(
            [x2[:, q * D:(q + 1) * D].reshape(bb, 1, D) for q in range(S)], axis=1)
        x = x3.reshape(bb * S, D)                                   # residual input

        # packed bias / LayerNorm vector slab (f32)
        xt_b = v_ref[0:1, 0:D]
        ao_b = v_ref[1:2, 0:D]
        g1 = v_ref[2:3, 0:D]
        b1 = v_ref[3:4, 0:D]
        ib = v_ref[4:5, 0:I]
        ob = v_ref[5:6, 0:D]
        g2 = v_ref[6:7, 0:D]
        b2 = v_ref[7:8, 0:D]

        def dense(h, row0, rows, cols, bias):
            w = w_ref[row0:row0 + rows, 0:cols]
            return jnp.dot(h.astype(mxu_dtype), w,
                           preferred_element_type=jnp.float32) + bias

        # ---- BERTSelfAttention (Q = K = V = xtrans(x)) -------------------------------
        mixed = dense(x, O_XT, D, D, xt_b)                          # (bb*S, D)
        m3 = mixed.reshape(bb, S, D)                                # free leading split
        # gather heads with static lane slices; new LEADING batch axis -> single
        # leading-batch-dim einsums (Mosaic-supported form), no 4-D transposes.
        z = jnp.stack([m3[:, :, h * hs:(h + 1) * hs] for h in range(H)], axis=0)
        z = z.reshape(H * bb, S, hs)                                # free leading merge

        scores = jnp.einsum("nqd,nkd->nqk", z, z,
                            preferred_element_type=jnp.float32) * scale
        if has_mask:
            m = mask_ref[...]                                       # (bb, S) additive
            scores = (scores.reshape(H, bb, S, S)
                      + m[None, :, None, :]).reshape(H * bb, S, S)
        scores = scores - jnp.max(scores, axis=-1, keepdims=True)
        p = jnp.exp(scores)
        p = p * pl.reciprocal(jnp.sum(p, axis=-1, keepdims=True), approx=True)
        ctx = jnp.einsum("nqk,nkd->nqd", p, z,
                         preferred_element_type=jnp.float32)        # (H*bb, S, hs)
        ctx = ctx.reshape(H, bb, S, hs)
        ctx = jnp.concatenate([ctx[h] for h in range(H)], axis=-1)  # (bb, S, D)
        ctx = ctx.reshape(bb * S, D)

        # ---- BERTSelfOutput: dense + residual + LayerNorm ----------------------------
        h1 = _layernorm(dense(ctx, O_AO, D, D, ao_b) + x, g1, b1)

        # ---- BERTIntermediate + BERTOutput ------------------------------------------
        inter_act = _gelu_kernel(dense(h1, O_IW, D, I, ib))
        h2 = _layernorm(dense(inter_act, O_OW, I, D, ob) + h1, g2, b2)

        # ---- token-major (bb*S, D) -> lane-dense output block (bb, S*D) -------------
        h2 = h2.reshape(bb, S, D)                                   # free leading split
        out_ref[...] = jnp.concatenate([h2[:, q, :] for q in range(S)], axis=-1)

    return kernel


def bert_layer(hidden_states, attention_mask, params, num_heads, *,
               mxu_dtype=jnp.bfloat16):
    """Fused BERT layer.  attention_mask: additive mask reshapeable to (B, S), or None."""
    B, S, D = hidden_states.shape
    I = params["iw"].shape[1]
    assert D % num_heads == 0
    WC = max(D, I)

    # Pack all weights into one slab and all bias / LN vectors into another (2 DMAs).
    def pad_c(a):
        return jnp.pad(a, ((0, 0), (0, WC - a.shape[1])))

    wslab = jnp.concatenate(
        [pad_c(params["xt_w"]), pad_c(params["ao_w"]),
         pad_c(params["iw"]), pad_c(params["ow"])], axis=0).astype(mxu_dtype)
    vnames = ("xt_b", "ao_b", "g1", "b1", "ib", "ob", "g2", "b2")
    vslab = jnp.concatenate(
        [pad_c(params[k].reshape(1, -1)) for k in vnames], axis=0).astype(jnp.float32)
    WR = wslab.shape[0]

    # Lane-dense activation view: (B, S*D); S*D = 256 is a multiple of 128 here.
    x2 = hidden_states.reshape(B, S * D).astype(jnp.float32)
    has_mask = attention_mask is not None

    in_specs = [pl.BlockSpec((B, S * D), lambda b: (b, 0))]
    args = [x2]
    if has_mask:
        in_specs.append(pl.BlockSpec((B, S), lambda b: (b, 0)))
        args.append(attention_mask.reshape(B, S).astype(jnp.float32))
    in_specs += [pl.BlockSpec((WR, WC), lambda b: (0, 0)),
                 pl.BlockSpec((len(vnames), WC), lambda b: (0, 0))]
    args += [wslab, vslab]

    kernel = make_bert_layer_kernel(batch=B, seq=S, dim=D, inter=I, heads=num_heads,
                                    has_mask=has_mask, mxu_dtype=mxu_dtype)

    out = pl.pallas_call(
        kernel,
        out_shape=jax.ShapeDtypeStruct((B, S * D), jnp.float32),
        grid_spec=pltpu.PrefetchScalarGridSpec(
            num_scalar_prefetch=0,
            grid=(1,),                      # single collapsed block (latency-bound size)
            in_specs=in_specs,
            out_specs=pl.BlockSpec((B, S * D), lambda b: (b, 0)),
        ),
        compiler_params=pltpu.CompilerParams(
            dimension_semantics=("arbitrary",),
        ),
    )(*args)
    return out.reshape(B, S, D)


# ----------------------------- pure-JAX reference ----------------------------------------

def reference(x, attention_mask, p, num_heads):
    B, S, D = x.shape
    hs = D // num_heads
    mixed = x @ p["xt_w"] + p["xt_b"]
    xl = mixed.reshape(B, S, num_heads, hs).transpose(0, 2, 1, 3)          # (B,H,S,hs)
    scores = jnp.einsum("bhqd,bhkd->bhqk", xl, xl) / math.sqrt(hs)
    if attention_mask is not None:
        scores = scores + attention_mask.reshape(B, 1, 1, S)
    scores = scores - jnp.max(scores, axis=-1, keepdims=True)
    probs = jnp.exp(scores)
    probs = probs / jnp.sum(probs, axis=-1, keepdims=True)
    ctx = jnp.einsum("bhqk,bhkd->bhqd", probs, xl).transpose(0, 2, 1, 3).reshape(B, S, D)
    attn = ctx @ p["ao_w"] + p["ao_b"]
    h1 = _layernorm(attn + x, p["g1"], p["b1"])
    inter = _gelu_ref(h1 @ p["iw"] + p["ib"])
    out = inter @ p["ow"] + p["ob"]
    return _layernorm(out + h1, p["g2"], p["b2"])


# ----------------------------- main -------------------------------------------------------

if __name__ == "__main__":
    # small config: input_dim=32, num_attention_heads=4, intermediate_size=64, seq=8
    B, S, D, I, H = 2, 8, 32, 64, 4

    key = jax.random.PRNGKey(0)
    keys = jax.random.split(key, 12)
    init = lambda k, shape: (0.02 * jax.random.normal(k, shape)).astype(jnp.float32)

    params = {
        "xt_w": init(keys[0], (D, D)), "xt_b": init(keys[1], (1, D)),
        "ao_w": init(keys[2], (D, D)), "ao_b": init(keys[3], (1, D)),
        "g1":   jnp.ones((1, D), jnp.float32), "b1": jnp.zeros((1, D), jnp.float32),
        "iw":   init(keys[4], (D, I)), "ib":   init(keys[5], (1, I)),
        "ow":   init(keys[6], (I, D)), "ob":   init(keys[7], (1, D)),
        "g2":   jnp.ones((1, D), jnp.float32), "b2": jnp.zeros((1, D), jnp.float32),
    }

    x = jax.random.normal(keys[8], (B, S, D), jnp.float32)

    # Case 1 (CMR-FG usage, default bf16 MXU operands): the extended mask from an
    # all-ones attention_mask is identically zero, so no mask input / DMA / add.
    # Looser tolerance covers bf16 matmul operands + approx-EUP softmax reciprocal.
    y = jax.block_until_ready(bert_layer(x, None, params, num_heads=H))
    y_ref = reference(x, None, params, num_heads=H)
    assert y.shape == (B, S, D)
    assert jnp.allclose(y, y_ref, atol=1e-2, rtol=1e-2), \
        f"bf16 path max abs err {jnp.max(jnp.abs(y - y_ref))}"

    # Case 2: nonzero additive attention mask + f32 MXU operands (tight semantic check).
    base = (jax.random.uniform(keys[9], (B, S)) > 0.3).astype(jnp.float32)
    ext_mask = ((1.0 - base) * -10000.0).reshape(B, 1, 1, S)
    y2 = jax.block_until_ready(
        bert_layer(x, ext_mask, params, num_heads=H, mxu_dtype=jnp.float32))
    y2_ref = reference(x, ext_mask, params, num_heads=H)
    assert jnp.allclose(y2, y2_ref, atol=2e-3, rtol=2e-3), \
        f"f32 path max abs err {jnp.max(jnp.abs(y2 - y2_ref))}"

    print("KERNEL_OK")
</pallas_src>

<mosaic_0001>
module attributes {stable_mosaic.version = 11 : i64} {
  func.func @kernel(%arg0: i32, %arg1: memref<2x256xf32, #tpu.memory_space<vmem>>, %arg2: memref<160x64xbf16, #tpu.memory_space<vmem>>, %arg3: memref<8x64xf32, #tpu.memory_space<vmem>>, %arg4: memref<2x256xf32, #tpu.memory_space<vmem>>) attributes {dimension_semantics = [#tpu.dimension_semantics<arbitrary>], iteration_bounds = array<i64: 1>, scalar_prefetch = 0 : i64, scratch_operands = 0 : i64, tpu.core_type = #tpu.core_type<tc>, window_params = [{transform_indices = @transform_0, window_bounds = array<i64: 2, 256>}, {pipeline_mode = #tpu.pipeline_mode<synchronous>, transform_indices = @transform_1, window_bounds = array<i64: 160, 64>}, {pipeline_mode = #tpu.pipeline_mode<synchronous>, transform_indices = @transform_2, window_bounds = array<i64: 8, 64>}, {transform_indices = @transform_3, window_bounds = array<i64: 2, 256>}]} {
    %c0 = arith.constant 0 : index
    %c0_0 = arith.constant 0 : index
    %0 = vector.load %arg1[%c0, %c0_0] : memref<2x256xf32, #tpu.memory_space<vmem>>, vector<2x256xf32>
    %1 = vector.extract_strided_slice %0 {offsets = [0, 0], sizes = [2, 32], strides = [1, 1]} : vector<2x256xf32> to vector<2x32xf32>
    %2 = vector.shape_cast %1 : vector<2x32xf32> to vector<2x1x32xf32>
    %3 = vector.extract_strided_slice %0 {offsets = [0, 32], sizes = [2, 32], strides = [1, 1]} : vector<2x256xf32> to vector<2x32xf32>
    %4 = vector.shape_cast %3 : vector<2x32xf32> to vector<2x1x32xf32>
    %5 = vector.extract_strided_slice %0 {offsets = [0, 64], sizes = [2, 32], strides = [1, 1]} : vector<2x256xf32> to vector<2x32xf32>
    %6 = vector.shape_cast %5 : vector<2x32xf32> to vector<2x1x32xf32>
    %7 = vector.extract_strided_slice %0 {offsets = [0, 96], sizes = [2, 32], strides = [1, 1]} : vector<2x256xf32> to vector<2x32xf32>
    %8 = vector.shape_cast %7 : vector<2x32xf32> to vector<2x1x32xf32>
    %9 = vector.extract_strided_slice %0 {offsets = [0, 128], sizes = [2, 32], strides = [1, 1]} : vector<2x256xf32> to vector<2x32xf32>
    %10 = vector.shape_cast %9 : vector<2x32xf32> to vector<2x1x32xf32>
    %11 = vector.extract_strided_slice %0 {offsets = [0, 160], sizes = [2, 32], strides = [1, 1]} : vector<2x256xf32> to vector<2x32xf32>
    %12 = vector.shape_cast %11 : vector<2x32xf32> to vector<2x1x32xf32>
    %13 = vector.extract_strided_slice %0 {offsets = [0, 192], sizes = [2, 32], strides = [1, 1]} : vector<2x256xf32> to vector<2x32xf32>
    %14 = vector.shape_cast %13 : vector<2x32xf32> to vector<2x1x32xf32>
    %15 = vector.extract_strided_slice %0 {offsets = [0, 224], sizes = [2, 32], strides = [1, 1]} : vector<2x256xf32> to vector<2x32xf32>
    %16 = vector.shape_cast %15 : vector<2x32xf32> to vector<2x1x32xf32>
    %17 = tpu.concatenate %2, %4, %6, %8, %10, %12, %14, %16 in 1 : vector<2x1x32xf32>, vector<2x1x32xf32>, vector<2x1x32xf32>, vector<2x1x32xf32>, vector<2x1x32xf32>, vector<2x1x32xf32>, vector<2x1x32xf32>, vector<2x1x32xf32> -> vector<2x8x32xf32>
    %18 = vector.shape_cast %17 : vector<2x8x32xf32> to vector<16x32xf32>
    %c0_1 = arith.constant 0 : index
    %c0_2 = arith.constant 0 : index
    %19 = vector.load %arg3[%c0_1, %c0_2] : memref<8x64xf32, #tpu.memory_space<vmem>>, vector<1x32xf32>
    %c1 = arith.constant 1 : index
    %c0_3 = arith.constant 0 : index
    %20 = vector.load %arg3[%c1, %c0_3] : memref<8x64xf32, #tpu.memory_space<vmem>>, vector<1x32xf32>
    %c2 = arith.constant 2 : index
    %c0_4 = arith.constant 0 : index
    %21 = vector.load %arg3[%c2, %c0_4] : memref<8x64xf32, #tpu.memory_space<vmem>>, vector<1x32xf32>
    %c3 = arith.constant 3 : index
    %c0_5 = arith.constant 0 : index
    %22 = vector.load %arg3[%c3, %c0_5] : memref<8x64xf32, #tpu.memory_space<vmem>>, vector<1x32xf32>
    %c4 = arith.constant 4 : index
    %c0_6 = arith.constant 0 : index
    %23 = vector.load %arg3[%c4, %c0_6] : memref<8x64xf32, #tpu.memory_space<vmem>>, vector<1x64xf32>
    %c5 = arith.constant 5 : index
    %c0_7 = arith.constant 0 : index
    %24 = vector.load %arg3[%c5, %c0_7] : memref<8x64xf32, #tpu.memory_space<vmem>>, vector<1x32xf32>
    %c6 = arith.constant 6 : index
    %c0_8 = arith.constant 0 : index
    %25 = vector.load %arg3[%c6, %c0_8] : memref<8x64xf32, #tpu.memory_space<vmem>>, vector<1x32xf32>
    %c7 = arith.constant 7 : index
    %c0_9 = arith.constant 0 : index
    %26 = vector.load %arg3[%c7, %c0_9] : memref<8x64xf32, #tpu.memory_space<vmem>>, vector<1x32xf32>
    %c0_10 = arith.constant 0 : index
    %c0_11 = arith.constant 0 : index
    %27 = vector.load %arg2[%c0_10, %c0_11] : memref<160x64xbf16, #tpu.memory_space<vmem>>, vector<32x32xbf16>
    %28 = arith.truncf %18 : vector<16x32xf32> to vector<16x32xbf16>
    %cst = arith.constant dense<0.000000e+00> : vector<16x32xf32>
    %29 = tpu.matmul %28, %27, %cst {dimension_numbers = #tpu.dot_dimension_numbers<[1], [0], [0], [1], [0, 0, 1, 1], [], []>} : vector<16x32xbf16>, vector<32x32xbf16>, vector<16x32xf32> -> vector<16x32xf32>
    %30 = vector.broadcast %19 : vector<1x32xf32> to vector<16x32xf32>
    %31 = arith.addf %29, %30 : vector<16x32xf32>
    %32 = vector.shape_cast %31 : vector<16x32xf32> to vector<2x8x32xf32>
    %33 = vector.extract_strided_slice %32 {offsets = [0, 0, 0], sizes = [2, 8, 8], strides = [1, 1, 1]} : vector<2x8x32xf32> to vector<2x8x8xf32>
    %34 = vector.extract_strided_slice %32 {offsets = [0, 0, 8], sizes = [2, 8, 8], strides = [1, 1, 1]} : vector<2x8x32xf32> to vector<2x8x8xf32>
    %35 = vector.extract_strided_slice %32 {offsets = [0, 0, 16], sizes = [2, 8, 8], strides = [1, 1, 1]} : vector<2x8x32xf32> to vector<2x8x8xf32>
    %36 = vector.extract_strided_slice %32 {offsets = [0, 0, 24], sizes = [2, 8, 8], strides = [1, 1, 1]} : vector<2x8x32xf32> to vector<2x8x8xf32>
    %37 = vector.shape_cast %33 : vector<2x8x8xf32> to vector<1x2x8x8xf32>
    %38 = vector.shape_cast %34 : vector<2x8x8xf32> to vector<1x2x8x8xf32>
    %39 = vector.shape_cast %35 : vector<2x8x8xf32> to vector<1x2x8x8xf32>
    %40 = vector.shape_cast %36 : vector<2x8x8xf32> to vector<1x2x8x8xf32>
    %41 = tpu.concatenate %37, %38, %39, %40 in 0 : vector<1x2x8x8xf32>, vector<1x2x8x8xf32>, vector<1x2x8x8xf32>, vector<1x2x8x8xf32> -> vector<4x2x8x8xf32>
    %42 = vector.shape_cast %41 : vector<4x2x8x8xf32> to vector<8x8x8xf32>
    "tpu.trace_start"() <{level = 10 : i32, message = "nqd,nkd->nqk"}> : () -> ()
    %cst_12 = arith.constant dense<0.000000e+00> : vector<8x8x8xf32>
    %43 = tpu.matmul %42, %42, %cst_12 {dimension_numbers = #tpu.dot_dimension_numbers<[2], [2], [1], [1], [0, 0, 0, 1, 1, 1], [0], [0]>} : vector<8x8x8xf32>, vector<8x8x8xf32>, vector<8x8x8xf32> -> vector<8x8x8xf32>
    "tpu.trace_stop"() : () -> ()
    %cst_13 = arith.constant 0.353553385 : f32
    %44 = vector.broadcast %cst_13 : f32 to vector<8x8x8xf32>
    %45 = arith.mulf %43, %44 : vector<8x8x8xf32>
    %cst_14 = arith.constant dense<0xFF800000> : vector<8x8xf32>
    %46 = vector.multi_reduction <maximumf>, %45, %cst_14 [2] : vector<8x8x8xf32> to vector<8x8xf32>
    %47 = vector.shape_cast %46 : vector<8x8xf32> to vector<8x8x1xf32>
    %48 = vector.broadcast %47 : vector<8x8x1xf32> to vector<8x8x8xf32>
    %49 = arith.subf %45, %48 : vector<8x8x8xf32>
    %50 = math.exp %49 : vector<8x8x8xf32>
    %cst_15 = arith.constant dense<0.000000e+00> : vector<8x8xf32>
    %51 = vector.multi_reduction <add>, %50, %cst_15 [2] : vector<8x8x8xf32> to vector<8x8xf32>
    %52 = vector.shape_cast %51 : vector<8x8xf32> to vector<8x8x1xf32>
    %53 = tpu.reciprocal %52 {approx = true} : vector<8x8x1xf32> -> vector<8x8x1xf32>
    %54 = vector.broadcast %53 : vector<8x8x1xf32> to vector<8x8x8xf32>
    %55 = arith.mulf %50, %54 : vector<8x8x8xf32>
    "tpu.trace_start"() <{level = 10 : i32, message = "nqk,nkd->nqd"}> : () -> ()
    %cst_16 = arith.constant dense<0.000000e+00> : vector<8x8x8xf32>
    %56 = tpu.matmul %55, %42, %cst_16 {dimension_numbers = #tpu.dot_dimension_numbers<[2], [1], [1], [2], [0, 0, 0, 1, 1, 2], [0], [0]>} : vector<8x8x8xf32>, vector<8x8x8xf32>, vector<8x8x8xf32> -> vector<8x8x8xf32>
    "tpu.trace_stop"() : () -> ()
    %57 = vector.shape_cast %56 : vector<8x8x8xf32> to vector<4x2x8x8xf32>
    %58 = vector.extract_strided_slice %57 {offsets = [0, 0, 0, 0], sizes = [1, 2, 8, 8], strides = [1, 1, 1, 1]} : vector<4x2x8x8xf32> to vector<1x2x8x8xf32>
    %59 = vector.shape_cast %58 : vector<1x2x8x8xf32> to vector<2x8x8xf32>
    %60 = vector.extract_strided_slice %57 {offsets = [1, 0, 0, 0], sizes = [1, 2, 8, 8], strides = [1, 1, 1, 1]} : vector<4x2x8x8xf32> to vector<1x2x8x8xf32>
    %61 = vector.shape_cast %60 : vector<1x2x8x8xf32> to vector<2x8x8xf32>
    %62 = vector.extract_strided_slice %57 {offsets = [2, 0, 0, 0], sizes = [1, 2, 8, 8], strides = [1, 1, 1, 1]} : vector<4x2x8x8xf32> to vector<1x2x8x8xf32>
    %63 = vector.shape_cast %62 : vector<1x2x8x8xf32> to vector<2x8x8xf32>
    %64 = vector.extract_strided_slice %57 {offsets = [3, 0, 0, 0], sizes = [1, 2, 8, 8], strides = [1, 1, 1, 1]} : vector<4x2x8x8xf32> to vector<1x2x8x8xf32>
    %65 = vector.shape_cast %64 : vector<1x2x8x8xf32> to vector<2x8x8xf32>
    %66 = tpu.concatenate %59, %61, %63, %65 in 2 : vector<2x8x8xf32>, vector<2x8x8xf32>, vector<2x8x8xf32>, vector<2x8x8xf32> -> vector<2x8x32xf32>
    %67 = vector.shape_cast %66 : vector<2x8x32xf32> to vector<16x32xf32>
    %c32 = arith.constant 32 : index
    %c0_17 = arith.constant 0 : index
    %68 = vector.load %arg2[%c32, %c0_17] : memref<160x64xbf16, #tpu.memory_space<vmem>>, vector<32x32xbf16>
    %69 = arith.truncf %67 : vector<16x32xf32> to vector<16x32xbf16>
    %cst_18 = arith.constant dense<0.000000e+00> : vector<16x32xf32>
    %70 = tpu.matmul %69, %68, %cst_18 {dimension_numbers = #tpu.dot_dimension_numbers<[1], [0], [0], [1], [0, 0, 1, 1], [], []>} : vector<16x32xbf16>, vector<32x32xbf16>, vector<16x32xf32> -> vector<16x32xf32>
    %71 = vector.broadcast %20 : vector<1x32xf32> to vector<16x32xf32>
    %72 = arith.addf %70, %71 : vector<16x32xf32>
    %73 = arith.addf %72, %18 : vector<16x32xf32>
    %cst_19 = arith.constant dense<0.000000e+00> : vector<16xf32>
    %74 = vector.multi_reduction <add>, %73, %cst_19 [1] : vector<16x32xf32> to vector<16xf32>
    %75 = vector.shape_cast %74 : vector<16xf32> to vector<16x1xf32>
    %cst_20 = arith.constant 3.200000e+01 : f32
    %76 = vector.broadcast %cst_20 : f32 to vector<16x1xf32>
    %77 = arith.divf %75, %76 : vector<16x1xf32>
    %78 = vector.broadcast %77 : vector<16x1xf32> to vector<16x32xf32>
    %79 = arith.subf %73, %78 : vector<16x32xf32>
    %80 = arith.mulf %79, %79 : vector<16x32xf32>
    %cst_21 = arith.constant dense<0.000000e+00> : vector<16xf32>
    %81 = vector.multi_reduction <add>, %80, %cst_21 [1] : vector<16x32xf32> to vector<16xf32>
    %82 = vector.shape_cast %81 : vector<16xf32> to vector<16x1xf32>
    %cst_22 = arith.constant 3.200000e+01 : f32
    %83 = vector.broadcast %cst_22 : f32 to vector<16x1xf32>
    %84 = arith.divf %82, %83 : vector<16x1xf32>
    %cst_23 = arith.constant 9.99999996E-13 : f32
    %85 = vector.broadcast %cst_23 : f32 to vector<16x1xf32>
    %86 = arith.addf %84, %85 : vector<16x1xf32>
    %87 = math.rsqrt %86 : vector<16x1xf32>
    %88 = vector.broadcast %87 : vector<16x1xf32> to vector<16x32xf32>
    %89 = arith.mulf %79, %88 : vector<16x32xf32>
    %90 = vector.broadcast %21 : vector<1x32xf32> to vector<16x32xf32>
    %91 = arith.mulf %90, %89 : vector<16x32xf32>
    %92 = vector.broadcast %22 : vector<1x32xf32> to vector<16x32xf32>
    %93 = arith.addf %91, %92 : vector<16x32xf32>
    %c64 = arith.constant 64 : index
    %c0_24 = arith.constant 0 : index
    %94 = vector.load %arg2[%c64, %c0_24] : memref<160x64xbf16, #tpu.memory_space<vmem>>, vector<32x64xbf16>
    %95 = arith.truncf %93 : vector<16x32xf32> to vector<16x32xbf16>
    %cst_25 = arith.constant dense<0.000000e+00> : vector<16x64xf32>
    %96 = tpu.matmul %95, %94, %cst_25 {dimension_numbers = #tpu.dot_dimension_numbers<[1], [0], [0], [1], [0, 0, 1, 1], [], []>} : vector<16x32xbf16>, vector<32x64xbf16>, vector<16x64xf32> -> vector<16x64xf32>
    %97 = vector.broadcast %23 : vector<1x64xf32> to vector<16x64xf32>
    %98 = arith.addf %96, %97 : vector<16x64xf32>
    %cst_26 = arith.constant 5.000000e-01 : f32
    %99 = vector.broadcast %cst_26 : f32 to vector<16x64xf32>
    %100 = arith.mulf %98, %99 : vector<16x64xf32>
    %cst_27 = arith.constant 0.707106769 : f32
    %101 = vector.broadcast %cst_27 : f32 to vector<16x64xf32>
    %102 = arith.mulf %98, %101 : vector<16x64xf32>
    %cst_28 = arith.constant 0.000000e+00 : f32
    %103 = vector.broadcast %cst_28 : f32 to vector<16x64xf32>
    %104 = arith.cmpf olt, %102, %103 : vector<16x64xf32>
    %cst_29 = arith.constant -1.000000e+00 : f32
    %cst_30 = arith.constant 1.000000e+00 : f32
    %105 = vector.broadcast %cst_29 : f32 to vector<16x64xf32>
    %106 = vector.broadcast %cst_30 : f32 to vector<16x64xf32>
    %107 = arith.select %104, %105, %106 : vector<16x64xi1>, vector<16x64xf32>
    %108 = math.absf %102 : vector<16x64xf32>
    %cst_31 = arith.constant 0.327591091 : f32
    %109 = vector.broadcast %cst_31 : f32 to vector<16x64xf32>
    %110 = arith.mulf %109, %108 : vector<16x64xf32>
    %cst_32 = arith.constant 1.000000e+00 : f32
    %111 = vector.broadcast %cst_32 : f32 to vector<16x64xf32>
    %112 = arith.addf %111, %110 : vector<16x64xf32>
    %cst_33 = arith.constant 1.000000e+00 : f32
    %113 = vector.broadcast %cst_33 : f32 to vector<16x64xf32>
    %114 = arith.divf %113, %112 : vector<16x64xf32>
    %cst_34 = arith.constant 1.06140542 : f32
    %115 = vector.broadcast %cst_34 : f32 to vector<16x64xf32>
    %116 = arith.mulf %115, %114 : vector<16x64xf32>
    %cst_35 = arith.constant -1.45315206 : f32
    %117 = vector.broadcast %cst_35 : f32 to vector<16x64xf32>
    %118 = arith.addf %116, %117 : vector<16x64xf32>
    %119 = arith.mulf %118, %114 : vector<16x64xf32>
    %cst_36 = arith.constant 1.42141378 : f32
    %120 = vector.broadcast %cst_36 : f32 to vector<16x64xf32>
    %121 = arith.addf %119, %120 : vector<16x64xf32>
    %122 = arith.mulf %121, %114 : vector<16x64xf32>
    %cst_37 = arith.constant -0.284496725 : f32
    %123 = vector.broadcast %cst_37 : f32 to vector<16x64xf32>
    %124 = arith.addf %122, %123 : vector<16x64xf32>
    %125 = arith.mulf %124, %114 : vector<16x64xf32>
    %cst_38 = arith.constant 0.254829586 : f32
    %126 = vector.broadcast %cst_38 : f32 to vector<16x64xf32>
    %127 = arith.addf %125, %126 : vector<16x64xf32>
    %128 = arith.mulf %127, %114 : vector<16x64xf32>
    %cst_39 = arith.constant 0.000000e+00 : f32
    %129 = vector.broadcast %cst_39 : f32 to vector<16x64xf32>
    %130 = arith.subf %129, %108 : vector<16x64xf32>
    %131 = arith.mulf %130, %108 : vector<16x64xf32>
    %132 = math.exp %131 : vector<16x64xf32>
    %133 = arith.mulf %128, %132 : vector<16x64xf32>
    %cst_40 = arith.constant 1.000000e+00 : f32
    %134 = vector.broadcast %cst_40 : f32 to vector<16x64xf32>
    %135 = arith.subf %134, %133 : vector<16x64xf32>
    %136 = arith.mulf %107, %135 : vector<16x64xf32>
    %cst_41 = arith.constant 1.000000e+00 : f32
    %137 = vector.broadcast %cst_41 : f32 to vector<16x64xf32>
    %138 = arith.addf %137, %136 : vector<16x64xf32>
    %139 = arith.mulf %100, %138 : vector<16x64xf32>
    %c96 = arith.constant 96 : index
    %c0_42 = arith.constant 0 : index
    %140 = vector.load %arg2[%c96, %c0_42] : memref<160x64xbf16, #tpu.memory_space<vmem>>, vector<64x32xbf16>
    %141 = arith.truncf %139 : vector<16x64xf32> to vector<16x64xbf16>
    %cst_43 = arith.constant dense<0.000000e+00> : vector<16x32xf32>
    %142 = tpu.matmul %141, %140, %cst_43 {dimension_numbers = #tpu.dot_dimension_numbers<[1], [0], [0], [1], [0, 0, 1, 1], [], []>} : vector<16x64xbf16>, vector<64x32xbf16>, vector<16x32xf32> -> vector<16x32xf32>
    %143 = vector.broadcast %24 : vector<1x32xf32> to vector<16x32xf32>
    %144 = arith.addf %142, %143 : vector<16x32xf32>
    %145 = arith.addf %144, %93 : vector<16x32xf32>
    %cst_44 = arith.constant dense<0.000000e+00> : vector<16xf32>
    %146 = vector.multi_reduction <add>, %145, %cst_44 [1] : vector<16x32xf32> to vector<16xf32>
    %147 = vector.shape_cast %146 : vector<16xf32> to vector<16x1xf32>
    %cst_45 = arith.constant 3.200000e+01 : f32
    %148 = vector.broadcast %cst_45 : f32 to vector<16x1xf32>
    %149 = arith.divf %147, %148 : vector<16x1xf32>
    %150 = vector.broadcast %149 : vector<16x1xf32> to vector<16x32xf32>
    %151 = arith.subf %145, %150 : vector<16x32xf32>
    %152 = arith.mulf %151, %151 : vector<16x32xf32>
    %cst_46 = arith.constant dense<0.000000e+00> : vector<16xf32>
    %153 = vector.multi_reduction <add>, %152, %cst_46 [1] : vector<16x32xf32> to vector<16xf32>
    %154 = vector.shape_cast %153 : vector<16xf32> to vector<16x1xf32>
    %cst_47 = arith.constant 3.200000e+01 : f32
    %155 = vector.broadcast %cst_47 : f32 to vector<16x1xf32>
    %156 = arith.divf %154, %155 : vector<16x1xf32>
    %cst_48 = arith.constant 9.99999996E-13 : f32
    %157 = vector.broadcast %cst_48 : f32 to vector<16x1xf32>
    %158 = arith.addf %156, %157 : vector<16x1xf32>
    %159 = math.rsqrt %158 : vector<16x1xf32>
    %160 = vector.broadcast %159 : vector<16x1xf32> to vector<16x32xf32>
    %161 = arith.mulf %151, %160 : vector<16x32xf32>
    %162 = vector.broadcast %25 : vector<1x32xf32> to vector<16x32xf32>
    %163 = arith.mulf %162, %161 : vector<16x32xf32>
    %164 = vector.broadcast %26 : vector<1x32xf32> to vector<16x32xf32>
    %165 = arith.addf %163, %164 : vector<16x32xf32>
    %166 = vector.shape_cast %165 : vector<16x32xf32> to vector<2x8x32xf32>
    %167 = vector.extract_strided_slice %166 {offsets = [0, 0, 0], sizes = [2, 1, 32], strides = [1, 1, 1]} : vector<2x8x32xf32> to vector<2x1x32xf32>
    %168 = vector.shape_cast %167 : vector<2x1x32xf32> to vector<2x32xf32>
    %169 = vector.extract_strided_slice %166 {offsets = [0, 1, 0], sizes = [2, 1, 32], strides = [1, 1, 1]} : vector<2x8x32xf32> to vector<2x1x32xf32>
    %170 = vector.shape_cast %169 : vector<2x1x32xf32> to vector<2x32xf32>
    %171 = vector.extract_strided_slice %166 {offsets = [0, 2, 0], sizes = [2, 1, 32], strides = [1, 1, 1]} : vector<2x8x32xf32> to vector<2x1x32xf32>
    %172 = vector.shape_cast %171 : vector<2x1x32xf32> to vector<2x32xf32>
    %173 = vector.extract_strided_slice %166 {offsets = [0, 3, 0], sizes = [2, 1, 32], strides = [1, 1, 1]} : vector<2x8x32xf32> to vector<2x1x32xf32>
    %174 = vector.shape_cast %173 : vector<2x1x32xf32> to vector<2x32xf32>
    %175 = vector.extract_strided_slice %166 {offsets = [0, 4, 0], sizes = [2, 1, 32], strides = [1, 1, 1]} : vector<2x8x32xf32> to vector<2x1x32xf32>
    %176 = vector.shape_cast %175 : vector<2x1x32xf32> to vector<2x32xf32>
    %177 = vector.extract_strided_slice %166 {offsets = [0, 5, 0], sizes = [2, 1, 32], strides = [1, 1, 1]} : vector<2x8x32xf32> to vector<2x1x32xf32>
    %178 = vector.shape_cast %177 : vector<2x1x32xf32> to vector<2x32xf32>
    %179 = vector.extract_strided_slice %166 {offsets = [0, 6, 0], sizes = [2, 1, 32], strides = [1, 1, 1]} : vector<2x8x32xf32> to vector<2x1x32xf32>
    %180 = vector.shape_cast %179 : vector<2x1x32xf32> to vector<2x32xf32>
    %181 = vector.extract_strided_slice %166 {offsets = [0, 7, 0], sizes = [2, 1, 32], strides = [1, 1, 1]} : vector<2x8x32xf32> to vector<2x1x32xf32>
    %182 = vector.shape_cast %181 : vector<2x1x32xf32> to vector<2x32xf32>
    %183 = tpu.concatenate %168, %170, %172, %174, %176, %178, %180, %182 in 1 : vector<2x32xf32>, vector<2x32xf32>, vector<2x32xf32>, vector<2x32xf32>, vector<2x32xf32>, vector<2x32xf32>, vector<2x32xf32>, vector<2x32xf32> -> vector<2x256xf32>
    %c0_49 = arith.constant 0 : index
    %c0_50 = arith.constant 0 : index
    %184 = vector.load %arg4[%c0_49, %c0_50] : memref<2x256xf32, #tpu.memory_space<vmem>>, vector<2x256xf32>
    tpu.vector_store %arg4[%c0_49, %c0_50], %183 {strides = array<i32>} : memref<2x256xf32, #tpu.memory_space<vmem>>, vector<2x256xf32>,
    return
  }
  func.func @transform_0(%arg0: i32) -> (i32, i32) {
    %c0_i32 = arith.constant 0 : i32
    %c0_i32_0 = arith.constant 0 : i32
    return %arg0, %c0_i32 : i32, i32
  }
  func.func @transform_1(%arg0: i32) -> (i32, i32) {
    %c0_i32 = arith.constant 0 : i32
    %c0_i32_0 = arith.constant 0 : i32
    %c0_i32_1 = arith.constant 0 : i32
    return %c0_i32, %c0_i32_0 : i32, i32
  }
  func.func @transform_2(%arg0: i32) -> (i32, i32) {
    %c0_i32 = arith.constant 0 : i32
    %c0_i32_0 = arith.constant 0 : i32
    %c0_i32_1 = arith.constant 0 : i32
    return %c0_i32, %c0_i32_0 : i32, i32
  }
  func.func @transform_3(%arg0: i32) -> (i32, i32) {
    %c0_i32 = arith.constant 0 : i32
    %c0_i32_0 = arith.constant 0 : i32
    return %arg0, %c0_i32 : i32, i32
  }
}

</mosaic_0001>

<llo_original>
// kernel: tpu_custom_call.1
$region0: #{tpu_custom_call.1}
  #allocation0 [shape = 'u32[]', space=smem, size = 0x4, offset = 0x4, fixed_abs, tag = 'smem constant byte address 0x4 - core index']
  #allocation1 [shape = 'u32[72,128]{1,0:T(1,128)}', space=vmem, size = 0x9000, scoped, tag = 'internal scratch']
  %s0 = inlined_call_operand.vmem [shape: f32[2,256], index: 0, kind: input, shape index: {}]
  %s1 = inlined_call_operand.vmem [shape: bf16[160,64], index: 1, kind: input, shape index: {}]
  %s2 = inlined_call_operand.vmem [shape: f32[8,64], index: 2, kind: input, shape index: {}]
  %s3 = inlined_call_operand.hbm [shape: f32[2,256], index: 3, kind: output, shape index: {}]
  %s4 = sld [smem:[#allocation0]]
  $region22: #{tpu_custom_call.1} parent=0
    _
  %s6 = ssub.s32 1, %s4
  %s7 = scalar_select 0, %s6, %s4
  $region1: #{tpu_custom_call.1} parent=0
    #allocation2 [shape = 'u8[2048]{0}', space=vmem, size = 0x800, scoped, tag = 'output window, operand 0, single buffered']
    #allocation3 [shape = 's32[1]{0}', space=sflag, size = 0x4, scoped, tag = 'scoped memory for tpu_custom_call.1']
    %8 = vsyncpa [#allocation3], 0
    // Predicated region
    $region2: #{tpu_custom_call.1} parent=1 // pred_check
      _
    $region3: #{tpu_custom_call.1} parent=1 // pred_check_branch
      %10 = sbr.rel (0) target = $region5
    $region4: #{tpu_custom_call.1} parent=1 // pred_region
      _
    $region5: #{tpu_custom_call.1} parent=1 // pred_fallthru
      _
    // Predicated region
    $region6: #{tpu_custom_call.1} parent=1 // pred_check
      _
    $region7: #{tpu_custom_call.1} parent=1 // pred_check_branch
      %12 = sbr.rel (0) target = $region9
    $region8: #{tpu_custom_call.1} parent=1 // pred_region
      _
    $region9: #{tpu_custom_call.1} parent=1 // pred_fallthru
      _
    // Predicated region
    $region10: #{tpu_custom_call.1} parent=1 // pred_check
      _
    $region11: #{tpu_custom_call.1} parent=1 // pred_check_branch
      %14 = sbr.rel (0) target = $region13
    $region12: #{tpu_custom_call.1} parent=1 // pred_region
      _
    $region13: #{tpu_custom_call.1} parent=1 // pred_fallthru
      _
    %v16 = vld [vmem:[%s0] sm:$0xf]
    %v18 = vrot.slane %v16, 1
    %v19 = vrot.slane %v16, 2
    %v20 = vrot.slane %v16, 3
    %vm21 = vcmask 1040384
    %v22 = vsel %vm21, %v16, %v18
    %vm23 = vcmask 1042434
    %v24 = vsel %vm23, %v19, %v20
    %vm25 = vcmask 1041408
    %v26 = vsel %vm25, %v22, %v24
    %vm27 = vcmask 1041409
    %v28 = vsel %vm27, %v16, %v18
    %vm29 = vcmask 1043459
    %v30 = vsel %vm29, %v19, %v20
    %vm31 = vcmask 1042433
    %v32 = vsel %vm31, %v28, %v30
    %v33 = vrot.slane %v32, 1
    %v36 = vrot.slane %v26, 1
    %v37 = vrot.slane %v33, 1
    %38 = vrot.lane.b32.xlu0 %v26, 96
    %v39 = vpop.permute.xlu0 %38
    %40 = vrot.lane.b32.xlu0 %v33, 96
    %v41 = vpop.permute.xlu0 %40
    %v42 = vrot.slane %v39, 1
    %v43 = vrot.slane %v41, 1
    %44 = vrot.lane.b32.xlu0 %v26, 64
    %v45 = vpop.permute.xlu0 %44
    %46 = vrot.lane.b32.xlu0 %v33, 64
    %v47 = vpop.permute.xlu0 %46
    %v48 = vrot.slane %v45, 1
    %v49 = vrot.slane %v47, 1
    %50 = vrot.lane.b32.xlu0 %v26, 32
    %v51 = vpop.permute.xlu0 %50
    %52 = vrot.lane.b32.xlu0 %v33, 32
    %v53 = vpop.permute.xlu0 %52
    %v54 = vrot.slane %v51, 1
    %v55 = vrot.slane %v53, 1
    %v56 = vperm.slane %v26, 0
    %v57 = vperm.slane %v33, 0
    %58 = vrot.lane.b32.xlu0 %v56, 96
    %v59 = vpop.permute.xlu0 %58
    %60 = vrot.lane.b32.xlu0 %v57, 96
    %v61 = vpop.permute.xlu0 %60
    %64 = vrot.lane.b32.xlu0 %v56, 64
    %v65 = vpop.permute.xlu0 %64
    %66 = vrot.lane.b32.xlu0 %v57, 64
    %v67 = vpop.permute.xlu0 %66
    %70 = vrot.lane.b32.xlu0 %v56, 32
    %v71 = vpop.permute.xlu0 %70
    %72 = vrot.lane.b32.xlu0 %v57, 32
    %v73 = vpop.permute.xlu0 %72
    %v76 = vperm.slane %v36, 0
    %v77 = vperm.slane %v37, 0
    %v80 = vperm.slane %v42, 0
    %v81 = vperm.slane %v43, 0
    %v84 = vperm.slane %v48, 0
    %v85 = vperm.slane %v49, 0
    %v88 = vperm.slane %v54, 0
    %v89 = vperm.slane %v55, 0
    %v92 = vsel %vm21, %v26, %v59
    %v93 = vsel %vm21, %v33, %v61
    %v94 = vsel %vm25, %v92, %v65
    %v95 = vsel %vm25, %v93, %v67
    %vm96 = vcmask 1042432
    %v97 = vsel %vm96, %v94, %v71
    %v98 = vsel %vm96, %v95, %v73
    %vm99 = vcmask 1043456
    %v100 = vsel %vm99, %v97, %v76
    %v101 = vsel %vm99, %v98, %v77
    %vm102 = vcmask 1044480
    %v103 = vsel %vm102, %v100, %v80
    %v104 = vsel %vm102, %v101, %v81
    %vm105 = vcmask 1045504
    %v106 = vsel %vm105, %v103, %v84
    %v107 = vsel %vm105, %v104, %v85
    %vm108 = vcmask 1046528
    %v109 = vsel %vm108, %v106, %v88
    %v110 = vsel %vm108, %v107, %v89
    %v111 = vld [vmem:[%s2] sm:$0x1]
    %v112 = vld [vmem:[%s2 + $0x1] sm:$0x1]
    %v113 = vld [vmem:[%s2 + $0x2] sm:$0x1]
    %v114 = vld [vmem:[%s2 + $0x3] sm:$0x1]
    %v115 = vld [vmem:[%s2 + $0x4] sm:$0x1]
    %v116 = vld [vmem:[%s2 + $0x5] sm:$0x1]
    %v117 = vld [vmem:[%s2 + $0x6] sm:$0x1]
    %v118 = vld [vmem:[%s2 + $0x7] sm:$0x1]
    %v119 = vld [vmem:[%s1] sm:$0xf]
    %v120 = vld [vmem:[%s1 + $0x4] sm:$0xf]
    %v121 = vld [vmem:[%s1 + $0x8] sm:$0xf]
    %v122 = vld [vmem:[%s1 + $0xc] sm:$0xf]
    %v123 = vpack.c.bf16 %v110, %v109
    %v124 = vperm.slane %v111, 0
    %v129 = vunpack.c.l.b16 %v119
    %v130 = vunpack.c.l.b16 %v120
    %v131 = vunpack.c.l.b16 %v121
    %v132 = vunpack.c.l.b16 %v122
    %v133 = vpack.c.b16 %v130, %v129
    %v134 = vpack.c.b16 %v132, %v131
    %vm137 = vcmask 261120
    %v139 = vsel %vm137, %v123, 0
    %141 = vmatpush.bf16.msra.mxu0 0
    %142 = vmatpush.bf16.msra.mxu0 0
    %143 = vmatpush.bf16.msra.mxu0 0
    %144 = vmatpush.bf16.msra.mxu0 0
    %145 = vmatpush.bf16.msra.mxu0 0
    %146 = vmatpush.bf16.msra.mxu0 0
    %147 = vmatpush.bf16.msra.mxu0 %v134
    %148 = vmatpush.bf16.msra.mxu0 %v133
    %149 = vmatmul.bf16.gmra.mxu0 %v139
    %v150 = vpop.f32.mrf.mxu0
    %v151 = vadd.f32 %v124, %v150
    %v152 = vpop.f32.mrf.mxu0
    %v153 = vadd.f32 %v124, %v152
    %154 = vdwg.mxu0
    %157 = vrot.lane.b32.xlu0 %v151, 120
    %v158 = vpop.permute.xlu0 %157
    %159 = vrot.lane.b32.xlu0 %v153, 120
    %v160 = vpop.permute.xlu0 %159
    %163 = vrot.lane.b32.xlu0 %v151, 112
    %v164 = vpop.permute.xlu0 %163
    %165 = vrot.lane.b32.xlu0 %v153, 112
    %v166 = vpop.permute.xlu0 %165
    %169 = vrot.lane.b32.xlu0 %v151, 104
    %v170 = vpop.permute.xlu0 %169
    %171 = vrot.lane.b32.xlu0 %v153, 104
    %v172 = vpop.permute.xlu0 %171
    %vm175 = vcmask 64512
    %v176 = vsel %vm175, %v151, 0
    %178 = vmatpush.xpose.msra.mxu0 0.0
    %179 = vmatpush.xpose.msra.mxu0 0.0
    %180 = vmatpush.xpose.msra.mxu0 0.0
    %181 = vmatpush.xpose.msra.mxu0 0.0
    %182 = vmatpush.xpose.msra.mxu0 0.0
    %183 = vmatpush.xpose.msra.mxu0 0.0
    %184 = vmatpush.xpose.msra.mxu0 0.0
    %185 = vmatpush.xpose.msra.mxu0 0.0
    %186 = vmatpush.xpose.msra.mxu0 0.0
    %187 = vmatpush.xpose.msra.mxu0 0.0
    %188 = vmatpush.xpose.msra.mxu0 0.0
    %189 = vmatpush.xpose.msra.mxu0 0.0
    %190 = vmatpush.xpose.msra.mxu0 0.0
    %191 = vmatpush.xpose.msra.mxu0 0.0
    %192 = vmatpush.xpose.msra.mxu0 0.0
    %193 = vmatpush.xpose.msra.mxu0 %v176
    %194 = vmatmul.f32.gmra.mxu0 %v176
    %v195 = vpop.f32.mrf.mxu0
    %v196 = vadd.f32 0.0, %v195
    %197 = vdwg.mxu0
    %v198 = vsel %vm175, %v153, 0
    %200 = vmatpush.xpose.msra.mxu0 0.0
    %201 = vmatpush.xpose.msra.mxu0 0.0
    %202 = vmatpush.xpose.msra.mxu0 0.0
    %203 = vmatpush.xpose.msra.mxu0 0.0
    %204 = vmatpush.xpose.msra.mxu0 0.0
    %205 = vmatpush.xpose.msra.mxu0 0.0
    %206 = vmatpush.xpose.msra.mxu0 0.0
    %207 = vmatpush.xpose.msra.mxu0 0.0
    %208 = vmatpush.xpose.msra.mxu0 0.0
    %209 = vmatpush.xpose.msra.mxu0 0.0
    %210 = vmatpush.xpose.msra.mxu0 0.0
    %211 = vmatpush.xpose.msra.mxu0 0.0
    %212 = vmatpush.xpose.msra.mxu0 0.0
    %213 = vmatpush.xpose.msra.mxu0 0.0
    %214 = vmatpush.xpose.msra.mxu0 0.0
    %215 = vmatpush.xpose.msra.mxu0 %v198
    %216 = vmatmul.f32.gmra.mxu0 %v198
    %v217 = vpop.f32.mrf.mxu0
    %v218 = vadd.f32 0.0, %v217
    %219 = vdwg.mxu0
    %v220 = vsel %vm175, %v158, 0
    %222 = vmatpush.xpose.msra.mxu0 0.0
    %223 = vmatpush.xpose.msra.mxu0 0.0
    %224 = vmatpush.xpose.msra.mxu0 0.0
    %225 = vmatpush.xpose.msra.mxu0 0.0
    %226 = vmatpush.xpose.msra.mxu0 0.0
    %227 = vmatpush.xpose.msra.mxu0 0.0
    %228 = vmatpush.xpose.msra.mxu0 0.0
    %229 = vmatpush.xpose.msra.mxu0 0.0
    %230 = vmatpush.xpose.msra.mxu0 0.0
    %231 = vmatpush.xpose.msra.mxu0 0.0
    %232 = vmatpush.xpose.msra.mxu0 0.0
    %233 = vmatpush.xpose.msra.mxu0 0.0
    %234 = vmatpush.xpose.msra.mxu0 0.0
    %235 = vmatpush.xpose.msra.mxu0 0.0
    %236 = vmatpush.xpose.msra.mxu0 0.0
    %237 = vmatpush.xpose.msra.mxu0 %v220
    %238 = vmatmul.f32.gmra.mxu0 %v220
    %v239 = vpop.f32.mrf.mxu0
    %v240 = vadd.f32 0.0, %v239
    %241 = vdwg.mxu0
    %v242 = vsel %vm175, %v160, 0
    %244 = vmatpush.xpose.msra.mxu0 0.0
    %245 = vmatpush.xpose.msra.mxu0 0.0
    %246 = vmatpush.xpose.msra.mxu0 0.0
    %247 = vmatpush.xpose.msra.mxu0 0.0
    %248 = vmatpush.xpose.msra.mxu0 0.0
    %249 = vmatpush.xpose.msra.mxu0 0.0
    %250 = vmatpush.xpose.msra.mxu0 0.0
    %251 = vmatpush.xpose.msra.mxu0 0.0
    %252 = vmatpush.xpose.msra.mxu0 0.0
    %253 = vmatpush.xpose.msra.mxu0 0.0
    %254 = vmatpush.xpose.msra.mxu0 0.0
    %255 = vmatpush.xpose.msra.mxu0 0.0
    %256 = vmatpush.xpose.msra.mxu0 0.0
    %257 = vmatpush.xpose.msra.mxu0 0.0
    %258 = vmatpush.xpose.msra.mxu0 0.0
    %259 = vmatpush.xpose.msra.mxu0 %v242
    %260 = vmatmul.f32.gmra.mxu0 %v242
    %v261 = vpop.f32.mrf.mxu0
    %v262 = vadd.f32 0.0, %v261
    %263 = vdwg.mxu0
    %v264 = vsel %vm175, %v164, 0
    %266 = vmatpush.xpose.msra.mxu0 0.0
    %267 = vmatpush.xpose.msra.mxu0 0.0
    %268 = vmatpush.xpose.msra.mxu0 0.0
    %269 = vmatpush.xpose.msra.mxu0 0.0
    %270 = vmatpush.xpose.msra.mxu0 0.0
    %271 = vmatpush.xpose.msra.mxu0 0.0
    %272 = vmatpush.xpose.msra.mxu0 0.0
    %273 = vmatpush.xpose.msra.mxu0 0.0
    %274 = vmatpush.xpose.msra.mxu0 0.0
    %275 = vmatpush.xpose.msra.mxu0 0.0
    %276 = vmatpush.xpose.msra.mxu0 0.0
    %277 = vmatpush.xpose.msra.mxu0 0.0
    %278 = vmatpush.xpose.msra.mxu0 0.0
    %279 = vmatpush.xpose.msra.mxu0 0.0
    %280 = vmatpush.xpose.msra.mxu0 0.0
    %281 = vmatpush.xpose.msra.mxu0 %v264
    %282 = vmatmul.f32.gmra.mxu0 %v264
    %v283 = vpop.f32.mrf.mxu0
    %v284 = vadd.f32 0.0, %v283
    %285 = vdwg.mxu0
    %v286 = vsel %vm175, %v166, 0
    %288 = vmatpush.xpose.msra.mxu0 0.0
    %289 = vmatpush.xpose.msra.mxu0 0.0
    %290 = vmatpush.xpose.msra.mxu0 0.0
    %291 = vmatpush.xpose.msra.mxu0 0.0
    %292 = vmatpush.xpose.msra.mxu0 0.0
    %293 = vmatpush.xpose.msra.mxu0 0.0
    %294 = vmatpush.xpose.msra.mxu0 0.0
    %295 = vmatpush.xpose.msra.mxu0 0.0
    %296 = vmatpush.xpose.msra.mxu0 0.0
    %297 = vmatpush.xpose.msra.mxu0 0.0
    %298 = vmatpush.xpose.msra.mxu0 0.0
    %299 = vmatpush.xpose.msra.mxu0 0.0
    %300 = vmatpush.xpose.msra.mxu0 0.0
    %301 = vmatpush.xpose.msra.mxu0 0.0
    %302 = vmatpush.xpose.msra.mxu0 0.0
    %303 = vmatpush.xpose.msra.mxu0 %v286
    %304 = vmatmul.f32.gmra.mxu0 %v286
    %v305 = vpop.f32.mrf.mxu0
    %v306 = vadd.f32 0.0, %v305
    %307 = vdwg.mxu0
    %v308 = vsel %vm175, %v170, 0
    %310 = vmatpush.xpose.msra.mxu0 0.0
    %311 = vmatpush.xpose.msra.mxu0 0.0
    %312 = vmatpush.xpose.msra.mxu0 0.0
    %313 = vmatpush.xpose.msra.mxu0 0.0
    %314 = vmatpush.xpose.msra.mxu0 0.0
    %315 = vmatpush.xpose.msra.mxu0 0.0
    %316 = vmatpush.xpose.msra.mxu0 0.0
    %317 = vmatpush.xpose.msra.mxu0 0.0
    %318 = vmatpush.xpose.msra.mxu0 0.0
    %319 = vmatpush.xpose.msra.mxu0 0.0
    %320 = vmatpush.xpose.msra.mxu0 0.0
    %321 = vmatpush.xpose.msra.mxu0 0.0
    %322 = vmatpush.xpose.msra.mxu0 0.0
    %323 = vmatpush.xpose.msra.mxu0 0.0
    %324 = vmatpush.xpose.msra.mxu0 0.0
    %325 = vmatpush.xpose.msra.mxu0 %v308
    %326 = vmatmul.f32.gmra.mxu0 %v308
    %v327 = vpop.f32.mrf.mxu0
    %v328 = vadd.f32 0.0, %v327
    %329 = vdwg.mxu0
    %v330 = vsel %vm175, %v172, 0
    %332 = vmatpush.xpose.msra.mxu0 0.0
    %333 = vmatpush.xpose.msra.mxu0 0.0
    %334 = vmatpush.xpose.msra.mxu0 0.0
    %335 = vmatpush.xpose.msra.mxu0 0.0
    %336 = vmatpush.xpose.msra.mxu0 0.0
    %337 = vmatpush.xpose.msra.mxu0 0.0
    %338 = vmatpush.xpose.msra.mxu0 0.0
    %339 = vmatpush.xpose.msra.mxu0 0.0
    %340 = vmatpush.xpose.msra.mxu0 0.0
    %341 = vmatpush.xpose.msra.mxu0 0.0
    %342 = vmatpush.xpose.msra.mxu0 0.0
    %343 = vmatpush.xpose.msra.mxu0 0.0
    %344 = vmatpush.xpose.msra.mxu0 0.0
    %345 = vmatpush.xpose.msra.mxu0 0.0
    %346 = vmatpush.xpose.msra.mxu0 0.0
    %347 = vmatpush.xpose.msra.mxu0 %v330
    %348 = vmatmul.f32.gmra.mxu0 %v330
    %v349 = vpop.f32.mrf.mxu0
    %v350 = vadd.f32 0.0, %v349
    %351 = vdwg.mxu0
    %v352 = vmul.f32 %v196, 0.35355338
    %v353 = vmul.f32 %v218, 0.35355338
    %v354 = vmul.f32 %v240, 0.35355338
    %v355 = vmul.f32 %v262, 0.35355338
    %v356 = vmul.f32 %v284, 0.35355338
    %v357 = vmul.f32 %v306, 0.35355338
    %v358 = vmul.f32 %v328, 0.35355338
    %v359 = vmul.f32 %v350, 0.35355338
    %v360 = vsel %vm175, %v352, -inf
    %361 = vmax.xlane.f32.xlu0 %v360
    %v362 = vpop.xlane.xlu0 %361
    %v363 = vsel %vm175, %v353, -inf
    %364 = vmax.xlane.f32.xlu0 %v363
    %v365 = vpop.xlane.xlu0 %364
    %v366 = vsel %vm175, %v354, -inf
    %367 = vmax.xlane.f32.xlu0 %v366
    %v368 = vpop.xlane.xlu0 %367
    %v369 = vsel %vm175, %v355, -inf
    %370 = vmax.xlane.f32.xlu0 %v369
    %v371 = vpop.xlane.xlu0 %370
    %v372 = vsel %vm175, %v356, -inf
    %373 = vmax.xlane.f32.xlu0 %v372
    %v374 = vpop.xlane.xlu0 %373
    %v375 = vsel %vm175, %v357, -inf
    %376 = vmax.xlane.f32.xlu0 %v375
    %v377 = vpop.xlane.xlu0 %376
    %v378 = vsel %vm175, %v358, -inf
    %379 = vmax.xlane.f32.xlu0 %v378
    %v380 = vpop.xlane.xlu0 %379
    %v381 = vsel %vm175, %v359, -inf
    %382 = vmax.xlane.f32.xlu0 %v381
    %v383 = vpop.xlane.xlu0 %382
    %v384 = vsub.f32 %v352, %v362
    %v385 = vsub.f32 %v353, %v365
    %v386 = vsub.f32 %v354, %v368
    %v387 = vsub.f32 %v355, %v371
    %v388 = vsub.f32 %v356, %v374
    %v389 = vsub.f32 %v357, %v377
    %v390 = vsub.f32 %v358, %v380
    %v391 = vsub.f32 %v359, %v383
    %v392 = vmul.f32 %v384, 1.442695
    %v393 = vpow.pop %v392
    %v394 = vmul.f32 %v385, 1.442695
    %v395 = vpow.pop %v394
    %v396 = vmul.f32 %v386, 1.442695
    %v397 = vpow.pop %v396
    %v398 = vmul.f32 %v387, 1.442695
    %v399 = vpow.pop %v398
    %v400 = vmul.f32 %v388, 1.442695
    %v401 = vpow.pop %v400
    %v402 = vmul.f32 %v389, 1.442695
    %v403 = vpow.pop %v402
    %v404 = vmul.f32 %v390, 1.442695
    %v405 = vpow.pop %v404
    %v406 = vmul.f32 %v391, 1.442695
    %v407 = vpow.pop %v406
    %v408 = vsel %vm175, %v393, 0.0
    %409 = vadd.xlane.f32.xlu0 %v408
    %v410 = vpop.xlane.xlu0 %409
    %v411 = vsel %vm175, %v395, 0.0
    %412 = vadd.xlane.f32.xlu0 %v411
    %v413 = vpop.xlane.xlu0 %412
    %v414 = vsel %vm175, %v397, 0.0
    %415 = vadd.xlane.f32.xlu0 %v414
    %v416 = vpop.xlane.xlu0 %415
    %v417 = vsel %vm175, %v399, 0.0
    %418 = vadd.xlane.f32.xlu0 %v417
    %v419 = vpop.xlane.xlu0 %418
    %v420 = vsel %vm175, %v401, 0.0
    %421 = vadd.xlane.f32.xlu0 %v420
    %v422 = vpop.xlane.xlu0 %421
    %v423 = vsel %vm175, %v403, 0.0
    %424 = vadd.xlane.f32.xlu0 %v423
    %v425 = vpop.xlane.xlu0 %424
    %v426 = vsel %vm175, %v405, 0.0
    %427 = vadd.xlane.f32.xlu0 %v426
    %v428 = vpop.xlane.xlu0 %427
    %v429 = vsel %vm175, %v407, 0.0
    %430 = vadd.xlane.f32.xlu0 %v429
    %v431 = vpop.xlane.xlu0 %430
    %v432 = vrcp.pop %v410
    %v433 = vrcp.pop %v413
    %v434 = vrcp.pop %v416
    %v435 = vrcp.pop %v419
    %v436 = vrcp.pop %v422
    %v437 = vrcp.pop %v425
    %v438 = vrcp.pop %v428
    %v439 = vrcp.pop %v431
    %v440 = vmul.f32 %v393, %v432
    %v441 = vmul.f32 %v395, %v433
    %v442 = vmul.f32 %v397, %v434
    %v443 = vmul.f32 %v399, %v435
    %v444 = vmul.f32 %v401, %v436
    %v445 = vmul.f32 %v403, %v437
    %v446 = vmul.f32 %v405, %v438
    %v447 = vmul.f32 %v407, %v439
    %v449 = vsel %vm175, %v440, 0
    %451 = vmatpush.msra.mxu0 0.0
    %452 = vmatpush.msra.mxu0 0.0
    %453 = vmatpush.msra.mxu0 0.0
    %454 = vmatpush.msra.mxu0 0.0
    %455 = vmatpush.msra.mxu0 0.0
    %456 = vmatpush.msra.mxu0 0.0
    %457 = vmatpush.msra.mxu0 0.0
    %458 = vmatpush.msra.mxu0 0.0
    %459 = vmatpush.msra.mxu0 0.0
    %460 = vmatpush.msra.mxu0 0.0
    %461 = vmatpush.msra.mxu0 0.0
    %462 = vmatpush.msra.mxu0 0.0
    %463 = vmatpush.msra.mxu0 0.0
    %464 = vmatpush.msra.mxu0 0.0
    %465 = vmatpush.msra.mxu0 0.0
    %466 = vmatpush.msra.mxu0 %v151
    %467 = vmatmul.f32.gmra.mxu0 %v449
    %v468 = vpop.f32.mrf.mxu0
    %v469 = vadd.f32 0.0, %v468
    %470 = vdwg.mxu0
    %v472 = vsel %vm175, %v441, 0
    %474 = vmatpush.msra.mxu0 0.0
    %475 = vmatpush.msra.mxu0 0.0
    %476 = vmatpush.msra.mxu0 0.0
    %477 = vmatpush.msra.mxu0 0.0
    %478 = vmatpush.msra.mxu0 0.0
    %479 = vmatpush.msra.mxu0 0.0
    %480 = vmatpush.msra.mxu0 0.0
    %481 = vmatpush.msra.mxu0 0.0
    %482 = vmatpush.msra.mxu0 0.0
    %483 = vmatpush.msra.mxu0 0.0
    %484 = vmatpush.msra.mxu0 0.0
    %485 = vmatpush.msra.mxu0 0.0
    %486 = vmatpush.msra.mxu0 0.0
    %487 = vmatpush.msra.mxu0 0.0
    %488 = vmatpush.msra.mxu0 0.0
    %489 = vmatpush.msra.mxu0 %v153
    %490 = vmatmul.f32.gmra.mxu0 %v472
    %v491 = vpop.f32.mrf.mxu0
    %v492 = vadd.f32 0.0, %v491
    %493 = vdwg.mxu0
    %v495 = vsel %vm175, %v442, 0
    %497 = vmatpush.msra.mxu0 0.0
    %498 = vmatpush.msra.mxu0 0.0
    %499 = vmatpush.msra.mxu0 0.0
    %500 = vmatpush.msra.mxu0 0.0
    %501 = vmatpush.msra.mxu0 0.0
    %502 = vmatpush.msra.mxu0 0.0
    %503 = vmatpush.msra.mxu0 0.0
    %504 = vmatpush.msra.mxu0 0.0
    %505 = vmatpush.msra.mxu0 0.0
    %506 = vmatpush.msra.mxu0 0.0
    %507 = vmatpush.msra.mxu0 0.0
    %508 = vmatpush.msra.mxu0 0.0
    %509 = vmatpush.msra.mxu0 0.0
    %510 = vmatpush.msra.mxu0 0.0
    %511 = vmatpush.msra.mxu0 0.0
    %512 = vmatpush.msra.mxu0 %v158
    %513 = vmatmul.f32.gmra.mxu0 %v495
    %v514 = vpop.f32.mrf.mxu0
    %v515 = vadd.f32 0.0, %v514
    %516 = vdwg.mxu0
    %v518 = vsel %vm175, %v443, 0
    %520 = vmatpush.msra.mxu0 0.0
    %521 = vmatpush.msra.mxu0 0.0
    %522 = vmatpush.msra.mxu0 0.0
    %523 = vmatpush.msra.mxu0 0.0
    %524 = vmatpush.msra.mxu0 0.0
    %525 = vmatpush.msra.mxu0 0.0
    %526 = vmatpush.msra.mxu0 0.0
    %527 = vmatpush.msra.mxu0 0.0
    %528 = vmatpush.msra.mxu0 0.0
    %529 = vmatpush.msra.mxu0 0.0
    %530 = vmatpush.msra.mxu0 0.0
    %531 = vmatpush.msra.mxu0 0.0
    %532 = vmatpush.msra.mxu0 0.0
    %533 = vmatpush.msra.mxu0 0.0
    %534 = vmatpush.msra.mxu0 0.0
    %535 = vmatpush.msra.mxu0 %v160
    %536 = vmatmul.f32.gmra.mxu0 %v518
    %v537 = vpop.f32.mrf.mxu0
    %v538 = vadd.f32 0.0, %v537
    %539 = vdwg.mxu0
    %v541 = vsel %vm175, %v444, 0
    %543 = vmatpush.msra.mxu0 0.0
    %544 = vmatpush.msra.mxu0 0.0
    %545 = vmatpush.msra.mxu0 0.0
    %546 = vmatpush.msra.mxu0 0.0
    %547 = vmatpush.msra.mxu0 0.0
    %548 = vmatpush.msra.mxu0 0.0
    %549 = vmatpush.msra.mxu0 0.0
    %550 = vmatpush.msra.mxu0 0.0
    %551 = vmatpush.msra.mxu0 0.0
    %552 = vmatpush.msra.mxu0 0.0
    %553 = vmatpush.msra.mxu0 0.0
    %554 = vmatpush.msra.mxu0 0.0
    %555 = vmatpush.msra.mxu0 0.0
    %556 = vmatpush.msra.mxu0 0.0
    %557 = vmatpush.msra.mxu0 0.0
    %558 = vmatpush.msra.mxu0 %v164
    %559 = vmatmul.f32.gmra.mxu0 %v541
    %v560 = vpop.f32.mrf.mxu0
    %v561 = vadd.f32 0.0, %v560
    %562 = vdwg.mxu0
    %v564 = vsel %vm175, %v445, 0
    %566 = vmatpush.msra.mxu0 0.0
    %567 = vmatpush.msra.mxu0 0.0
    %568 = vmatpush.msra.mxu0 0.0
    %569 = vmatpush.msra.mxu0 0.0
    %570 = vmatpush.msra.mxu0 0.0
    %571 = vmatpush.msra.mxu0 0.0
    %572 = vmatpush.msra.mxu0 0.0
    %573 = vmatpush.msra.mxu0 0.0
    %574 = vmatpush.msra.mxu0 0.0
    %575 = vmatpush.msra.mxu0 0.0
    %576 = vmatpush.msra.mxu0 0.0
    %577 = vmatpush.msra.mxu0 0.0
    %578 = vmatpush.msra.mxu0 0.0
    %579 = vmatpush.msra.mxu0 0.0
    %580 = vmatpush.msra.mxu0 0.0
    %581 = vmatpush.msra.mxu0 %v166
    %582 = vmatmul.f32.gmra.mxu0 %v564
    %v583 = vpop.f32.mrf.mxu0
    %v584 = vadd.f32 0.0, %v583
    %585 = vdwg.mxu0
    %v587 = vsel %vm175, %v446, 0
    %589 = vmatpush.msra.mxu0 0.0
    %590 = vmatpush.msra.mxu0 0.0
    %591 = vmatpush.msra.mxu0 0.0
    %592 = vmatpush.msra.mxu0 0.0
    %593 = vmatpush.msra.mxu0 0.0
    %594 = vmatpush.msra.mxu0 0.0
    %595 = vmatpush.msra.mxu0 0.0
    %596 = vmatpush.msra.mxu0 0.0
    %597 = vmatpush.msra.mxu0 0.0
    %598 = vmatpush.msra.mxu0 0.0
    %599 = vmatpush.msra.mxu0 0.0
    %600 = vmatpush.msra.mxu0 0.0
    %601 = vmatpush.msra.mxu0 0.0
    %602 = vmatpush.msra.mxu0 0.0
    %603 = vmatpush.msra.mxu0 0.0
    %604 = vmatpush.msra.mxu0 %v170
    %605 = vmatmul.f32.gmra.mxu0 %v587
    %v606 = vpop.f32.mrf.mxu0
    %v607 = vadd.f32 0.0, %v606
    %608 = vdwg.mxu0
    %v610 = vsel %vm175, %v447, 0
    %612 = vmatpush.msra.mxu0 0.0
    %613 = vmatpush.msra.mxu0 0.0
    %614 = vmatpush.msra.mxu0 0.0
    %615 = vmatpush.msra.mxu0 0.0
    %616 = vmatpush.msra.mxu0 0.0
    %617 = vmatpush.msra.mxu0 0.0
    %618 = vmatpush.msra.mxu0 0.0
    %619 = vmatpush.msra.mxu0 0.0
    %620 = vmatpush.msra.mxu0 0.0
    %621 = vmatpush.msra.mxu0 0.0
    %622 = vmatpush.msra.mxu0 0.0
    %623 = vmatpush.msra.mxu0 0.0
    %624 = vmatpush.msra.mxu0 0.0
    %625 = vmatpush.msra.mxu0 0.0
    %626 = vmatpush.msra.mxu0 0.0
    %627 = vmatpush.msra.mxu0 %v172
    %628 = vmatmul.f32.gmra.mxu0 %v610
    %v629 = vpop.f32.mrf.mxu0
    %v630 = vadd.f32 0.0, %v629
    %631 = vdwg.mxu0
    %634 = vrot.lane.b32.xlu0 %v515, 8
    %v635 = vpop.permute.xlu0 %634
    %636 = vrot.lane.b32.xlu0 %v538, 8
    %v637 = vpop.permute.xlu0 %636
    %642 = vrot.lane.b32.xlu0 %v561, 16
    %v643 = vpop.permute.xlu0 %642
    %644 = vrot.lane.b32.xlu0 %v584, 16
    %v645 = vpop.permute.xlu0 %644
    %650 = vrot.lane.b32.xlu0 %v607, 24
    %v651 = vpop.permute.xlu0 %650
    %652 = vrot.lane.b32.xlu0 %v630, 24
    %v653 = vpop.permute.xlu0 %652
    %v656 = vsel %vm175, %v469, %v635
    %v657 = vsel %vm175, %v492, %v637
    %vm658 = vcmask 130048
    %v659 = vsel %vm658, %v656, %v643
    %v660 = vsel %vm658, %v657, %v645
    %vm661 = vcmask 195584
    %v662 = vsel %vm661, %v659, %v651
    %v663 = vsel %vm661, %v660, %v653
    %v664 = vld [vmem:[%s1 + $0x10] sm:$0xf]
    %v665 = vld [vmem:[%s1 + $0x14] sm:$0xf]
    %v666 = vld [vmem:[%s1 + $0x18] sm:$0xf]
    %v667 = vld [vmem:[%s1 + $0x1c] sm:$0xf]
    %v668 = vpack.c.bf16 %v663, %v662
    %v669 = vperm.slane %v112, 0
    %v674 = vunpack.c.l.b16 %v664
    %v675 = vunpack.c.l.b16 %v665
    %v676 = vunpack.c.l.b16 %v666
    %v677 = vunpack.c.l.b16 %v667
    %v678 = vpack.c.b16 %v675, %v674
    %v679 = vpack.c.b16 %v677, %v676
    %v683 = vsel %vm137, %v668, 0
    %685 = vmatpush.bf16.msra.mxu0 0
    %686 = vmatpush.bf16.msra.mxu0 0
    %687 = vmatpush.bf16.msra.mxu0 0
    %688 = vmatpush.bf16.msra.mxu0 0
    %689 = vmatpush.bf16.msra.mxu0 0
    %690 = vmatpush.bf16.msra.mxu0 0
    %691 = vmatpush.bf16.msra.mxu0 %v679
    %692 = vmatpush.bf16.msra.mxu0 %v678
    %693 = vmatmul.bf16.gmra.mxu0 %v683
    %v694 = vpop.f32.mrf.mxu0
    %v695 = vadd.f32 %v669, %v694
    %v696 = vpop.f32.mrf.mxu0
    %v697 = vadd.f32 %v669, %v696
    %698 = vdwg.mxu0
    %v699 = vadd.f32 %v695, %v109
    %v700 = vadd.f32 %v697, %v110
    %v701 = vsel %vm137, %v699, 0.0
    %702 = vadd.xlane.f32.xlu0 %v701
    %v703 = vpop.xlane.xlu0 %702
    %v704 = vsel %vm137, %v700, 0.0
    %705 = vadd.xlane.f32.xlu0 %v704
    %v706 = vpop.xlane.xlu0 %705
    %v707 = vrcp.pop 32.0
    %v708 = vmul.f32 32.0, %v707
    %v709 = vsub.f32 1.0, %v708
    %v710 = vmul.f32 %v707, %v709
    %v711 = vadd.f32 %v707, %v710
    %vm712 = vweird.f32 %v707
    %v713 = vsel %vm712, %v707, %v711
    %v714 = vmul.f32 %v703, %v713
    %v715 = vmul.f32 %v706, %v713
    %v716 = vsub.f32 %v699, %v714
    %v717 = vsub.f32 %v700, %v715
    %v718 = vmul.f32 %v716, %v716
    %v719 = vmul.f32 %v717, %v717
    %v720 = vsel %vm137, %v718, 0.0
    %721 = vadd.xlane.f32.xlu0 %v720
    %v722 = vpop.xlane.xlu0 %721
    %v723 = vsel %vm137, %v719, 0.0
    %724 = vadd.xlane.f32.xlu0 %v723
    %v725 = vpop.xlane.xlu0 %724
    %v726 = vmul.f32 %v722, %v713
    %v727 = vmul.f32 %v725, %v713
    %v728 = vadd.f32 %v726, 1e-12
    %v729 = vadd.f32 %v727, 1e-12
    %v730 = vrsqrt.pop %v728
    %v731 = vmul.f32 %v730, %v728
    %v732 = vmul.f32 %v731, %v730
    %v733 = vmul.f32 0.5, %v732
    %v734 = vsub.f32 1.5, %v733
    %v735 = vmul.f32 %v730, %v734
    %vm736 = vweird.f32 %v728
    %vm737 = vweird.f32 %v730
    %vm738 = vmor %vm736, %vm737
    %v739 = vsel %vm738, %v730, %v735
    %v740 = vrsqrt.pop %v729
    %v741 = vmul.f32 %v740, %v729
    %v742 = vmul.f32 %v741, %v740
    %v743 = vmul.f32 0.5, %v742
    %v744 = vsub.f32 1.5, %v743
    %v745 = vmul.f32 %v740, %v744
    %vm746 = vweird.f32 %v729
    %vm747 = vweird.f32 %v740
    %vm748 = vmor %vm746, %vm747
    %v749 = vsel %vm748, %v740, %v745
    %v750 = vmul.f32 %v716, %v739
    %v751 = vmul.f32 %v717, %v749
    %v752 = vperm.slane %v113, 0
    %v753 = vmul.f32 %v752, %v750
    %v754 = vmul.f32 %v752, %v751
    %v755 = vperm.slane %v114, 0
    %v756 = vadd.f32 %v753, %v755
    %v757 = vadd.f32 %v754, %v755
    %v758 = vld [vmem:[%s1 + $0x20] sm:$0xf]
    %v759 = vld [vmem:[%s1 + $0x24] sm:$0xf]
    %v760 = vld [vmem:[%s1 + $0x28] sm:$0xf]
    %v761 = vld [vmem:[%s1 + $0x2c] sm:$0xf]
    %v762 = vpack.c.bf16 %v757, %v756
    %v763 = vperm.slane %v115, 0
    %v768 = vunpack.c.l.b16 %v758
    %v769 = vunpack.c.l.b16 %v759
    %v770 = vunpack.c.l.b16 %v760
    %v771 = vunpack.c.l.b16 %v761
    %v772 = vpack.c.b16 %v769, %v768
    %v773 = vpack.c.b16 %v771, %v770
    %v777 = vsel %vm137, %v762, 0
    %779 = vmatpush.bf16.msra.mxu0 0
    %780 = vmatpush.bf16.msra.mxu0 0
    %781 = vmatpush.bf16.msra.mxu0 0
    %782 = vmatpush.bf16.msra.mxu0 0
    %783 = vmatpush.bf16.msra.mxu0 0
    %784 = vmatpush.bf16.msra.mxu0 0
    %785 = vmatpush.bf16.msra.mxu0 %v773
    %786 = vmatpush.bf16.msra.mxu0 %v772
    %787 = vmatmul.bf16.gmra.mxu0 %v777
    %v788 = vpop.f32.mrf.mxu0
    %v789 = vadd.f32 %v763, %v788
    %v790 = vpop.f32.mrf.mxu0
    %v791 = vadd.f32 %v763, %v790
    %792 = vdwg.mxu0
    %v793 = vmul.f32 %v789, 0.5
    %v794 = vmul.f32 %v791, 0.5
    %v795 = vmul.f32 %v789, 0.70710677
    %v796 = vmul.f32 %v791, 0.70710677
    %vm797 = vcmp.lt.f32.partialorder %v795, 0.0
    %vm798 = vcmp.lt.f32.partialorder %v796, 0.0
    %v799 = vsel %vm797, -1.0, 1.0
    %v800 = vsel %vm798, -1.0, 1.0
    %v801 = vand.u32 2147483647, %v795
    %v802 = vand.u32 2147483647, %v796
    %v803 = vmul.f32 %v801, 0.3275911
    %v804 = vmul.f32 %v802, 0.3275911
    %v805 = vadd.f32 %v803, 1.0
    %v806 = vadd.f32 %v804, 1.0
    %v807 = vrcp.pop %v805
    %v808 = vmul.f32 %v805, %v807
    %v809 = vsub.f32 1.0, %v808
    %v810 = vmul.f32 %v807, %v809
    %v811 = vadd.f32 %v807, %v810
    %vm812 = vweird.f32 %v805
    %vm813 = vweird.f32 %v807
    %vm814 = vmor %vm812, %vm813
    %v815 = vsel %vm814, %v807, %v811
    %v816 = vand.u32 2147483647, %v805
    %vm817 = vcmp.eq.f32.partialorder %v816, 8.507059e+37
    %v818 = vand.u32 %v805, 2147483648
    %v819 = vor.u32 1.1754944e-38, %v818
    %v820 = vsel %vm817, %v819, %v815
    %v821 = vmul.f32 1.0, %v820
    %v822 = vrcp.pop %v806
    %v823 = vmul.f32 %v806, %v822
    %v824 = vsub.f32 1.0, %v823
    %v825 = vmul.f32 %v822, %v824
    %v826 = vadd.f32 %v822, %v825
    %vm827 = vweird.f32 %v806
    %vm828 = vweird.f32 %v822
    %vm829 = vmor %vm827, %vm828
    %v830 = vsel %vm829, %v822, %v826
    %v831 = vand.u32 2147483647, %v806
    %vm832 = vcmp.eq.f32.partialorder %v831, 8.507059e+37
    %v833 = vand.u32 %v806, 2147483648
    %v834 = vor.u32 1.1754944e-38, %v833
    %v835 = vsel %vm832, %v834, %v830
    %v836 = vmul.f32 1.0, %v835
    %v837 = vmul.f32 %v821, 1.0614054
    %v838 = vmul.f32 %v836, 1.0614054
    %v839 = vadd.f32 %v837, -1.4531521
    %v840 = vadd.f32 %v838, -1.4531521
    %v841 = vmul.f32 %v839, %v821
    %v842 = vmul.f32 %v840, %v836
    %v843 = vadd.f32 %v841, 1.4214138
    %v844 = vadd.f32 %v842, 1.4214138
    %v845 = vmul.f32 %v843, %v821
    %v846 = vmul.f32 %v844, %v836
    %v847 = vadd.f32 %v845, -0.28449672
    %v848 = vadd.f32 %v846, -0.28449672
    %v849 = vmul.f32 %v847, %v821
    %v850 = vmul.f32 %v848, %v836
    %v851 = vadd.f32 %v849, 0.2548296
    %v852 = vadd.f32 %v850, 0.2548296
    %v853 = vmul.f32 %v851, %v821
    %v854 = vmul.f32 %v852, %v836
    %v855 = vsub.f32 0.0, %v801
    %v856 = vsub.f32 0.0, %v802
    %v857 = vmul.f32 %v855, %v801
    %v858 = vmul.f32 %v856, %v802
    %v859 = vmul.f32 %v857, 1.442695
    %v860 = vpow.pop %v859
    %v861 = vmul.f32 %v858, 1.442695
    %v862 = vpow.pop %v861
    %v863 = vmul.f32 %v853, %v860
    %v864 = vmul.f32 %v854, %v862
    %v865 = vsub.f32 1.0, %v863
    %v866 = vsub.f32 1.0, %v864
    %v867 = vmul.f32 %v799, %v865
    %v868 = vmul.f32 %v800, %v866
    %v869 = vadd.f32 %v867, 1.0
    %v870 = vadd.f32 %v868, 1.0
    %v871 = vmul.f32 %v793, %v869
    %v872 = vmul.f32 %v794, %v870
    %v873 = vld [vmem:[%s1 + $0x30] sm:$0xf]
    %v874 = vld [vmem:[%s1 + $0x34] sm:$0xf]
    %v875 = vld [vmem:[%s1 + $0x38] sm:$0xf]
    %v876 = vld [vmem:[%s1 + $0x3c] sm:$0xf]
    %v877 = vld [vmem:[%s1 + $0x40] sm:$0xf]
    %v878 = vld [vmem:[%s1 + $0x44] sm:$0xf]
    %v879 = vld [vmem:[%s1 + $0x48] sm:$0xf]
    %v880 = vld [vmem:[%s1 + $0x4c] sm:$0xf]
    %v881 = vpack.c.bf16 %v872, %v871
    %v882 = vperm.slane %v116, 0
    %v891 = vunpack.c.l.b16 %v873
    %v892 = vunpack.c.l.b16 %v874
    %v893 = vunpack.c.l.b16 %v875
    %v894 = vunpack.c.l.b16 %v876
    %v895 = vunpack.c.l.b16 %v877
    %v896 = vunpack.c.l.b16 %v878
    %v897 = vunpack.c.l.b16 %v879
    %v898 = vunpack.c.l.b16 %v880
    %v899 = vpack.c.b16 %v892, %v891
    %v900 = vpack.c.b16 %v894, %v893
    %v901 = vpack.c.b16 %v896, %v895
    %v902 = vpack.c.b16 %v898, %v897
    %vm907 = vcmask 523264
    %v909 = vsel %vm907, %v881, 0
    %911 = vmatpush.bf16.msra.mxu0 0
    %912 = vmatpush.bf16.msra.mxu0 0
    %913 = vmatpush.bf16.msra.mxu0 0
    %914 = vmatpush.bf16.msra.mxu0 0
    %915 = vmatpush.bf16.msra.mxu0 %v902
    %916 = vmatpush.bf16.msra.mxu0 %v901
    %917 = vmatpush.bf16.msra.mxu0 %v900
    %918 = vmatpush.bf16.msra.mxu0 %v899
    %919 = vmatmul.bf16.gmra.mxu0 %v909
    %v920 = vpop.f32.mrf.mxu0
    %v921 = vadd.f32 %v882, %v920
    %v922 = vpop.f32.mrf.mxu0
    %v923 = vadd.f32 %v882, %v922
    %924 = vdwg.mxu0
    %v925 = vadd.f32 %v921, %v756
    %v926 = vadd.f32 %v923, %v757
    %v927 = vsel %vm137, %v925, 0.0
    %928 = vadd.xlane.f32.xlu0 %v927
    %v929 = vpop.xlane.xlu0 %928
    %v930 = vsel %vm137, %v926, 0.0
    %931 = vadd.xlane.f32.xlu0 %v930
    %v932 = vpop.xlane.xlu0 %931
    %v933 = vmul.f32 %v929, %v713
    %v934 = vmul.f32 %v932, %v713
    %v935 = vsub.f32 %v925, %v933
    %v936 = vsub.f32 %v926, %v934
    %v937 = vmul.f32 %v935, %v935
    %v938 = vmul.f32 %v936, %v936
    %v939 = vsel %vm137, %v937, 0.0
    %940 = vadd.xlane.f32.xlu0 %v939
    %v941 = vpop.xlane.xlu0 %940
    %v942 = vsel %vm137, %v938, 0.0
    %943 = vadd.xlane.f32.xlu0 %v942
    %v944 = vpop.xlane.xlu0 %943
    %v945 = vmul.f32 %v941, %v713
    %v946 = vmul.f32 %v944, %v713
    %v947 = vadd.f32 %v945, 1e-12
    %v948 = vadd.f32 %v946, 1e-12
    %v949 = vrsqrt.pop %v947
    %v950 = vmul.f32 %v949, %v947
    %v951 = vmul.f32 %v950, %v949
    %v952 = vmul.f32 0.5, %v951
    %v953 = vsub.f32 1.5, %v952
    %v954 = vmul.f32 %v949, %v953
    %vm955 = vweird.f32 %v947
    %vm956 = vweird.f32 %v949
    %vm957 = vmor %vm955, %vm956
    %v958 = vsel %vm957, %v949, %v954
    %v959 = vrsqrt.pop %v948
    %v960 = vmul.f32 %v959, %v948
    %v961 = vmul.f32 %v960, %v959
    %v962 = vmul.f32 0.5, %v961
    %v963 = vsub.f32 1.5, %v962
    %v964 = vmul.f32 %v959, %v963
    %vm965 = vweird.f32 %v948
    %vm966 = vweird.f32 %v959
    %vm967 = vmor %vm965, %vm966
    %v968 = vsel %vm967, %v959, %v964
    %v969 = vmul.f32 %v935, %v958
    %v970 = vmul.f32 %v936, %v968
    %v971 = vperm.slane %v117, 0
    %v972 = vmul.f32 %v971, %v969
    %v973 = vmul.f32 %v971, %v970
    %v974 = vperm.slane %v118, 0
    %v975 = vadd.f32 %v972, %v974
    %v976 = vadd.f32 %v973, %v974
    %v979 = vrot.slane %v976, 7
    %v980 = vsel %vm27, %v979, %v975
    %v982 = vrot.slane %v975, 1
    %v983 = vsel %vm27, %v976, %v982
    %984 = vrot.lane.b32.xlu0 %v983, 32
    %v985 = vpop.permute.xlu0 %984
    %v987 = vrot.slane %v975, 2
    %v988 = vrot.slane %v976, 1
    %v989 = vsel %vm27, %v988, %v987
    %990 = vrot.lane.b32.xlu0 %v989, 64
    %v991 = vpop.permute.xlu0 %990
    %v993 = vrot.slane %v975, 3
    %v994 = vrot.slane %v976, 2
    %v995 = vsel %vm27, %v994, %v993
    %996 = vrot.lane.b32.xlu0 %v995, 96
    %v997 = vpop.permute.xlu0 %996
    %v999 = vrot.slane %v975, 4
    %v1000 = vrot.slane %v976, 3
    %v1001 = vsel %vm27, %v1000, %v999
    %v1003 = vrot.slane %v975, 5
    %v1004 = vrot.slane %v976, 4
    %v1005 = vsel %vm27, %v1004, %v1003
    %1006 = vrot.lane.b32.xlu0 %v1005, 32
    %v1007 = vpop.permute.xlu0 %1006
    %v1009 = vrot.slane %v975, 6
    %v1010 = vrot.slane %v976, 5
    %v1011 = vsel %vm27, %v1010, %v1009
    %1012 = vrot.lane.b32.xlu0 %v1011, 64
    %v1013 = vpop.permute.xlu0 %1012
    %v1015 = vrot.slane %v975, 7
    %v1016 = vrot.slane %v976, 6
    %v1017 = vsel %vm27, %v1016, %v1015
    %1018 = vrot.lane.b32.xlu0 %v1017, 96
    %v1019 = vpop.permute.xlu0 %1018
    %v1021 = vsel %vm137, %v980, %v985
    %v1022 = vsel %vm907, %v1021, %v991
    %vm1023 = vcmask 785408
    %v1024 = vsel %vm1023, %v1022, %v997
    %v1025 = vsel %vm137, %v1001, %v1007
    %v1026 = vsel %vm907, %v1025, %v1013
    %v1027 = vsel %vm1023, %v1026, %v1019
    %v1030 = vrot.slane %v1027, 6
    %v1031 = vsel %vm25, %v1024, %v1030
    %1033 = vst [vmem:[#allocation2] sm:$0xf] %v1031
    // Predicated region
    $region14: #{tpu_custom_call.1} parent=1 // pred_check
      _
    $region15: #{tpu_custom_call.1} parent=1 // pred_check_branch
      %1035 = sbr.rel (0) target = $region17
    $region16: #{tpu_custom_call.1} parent=1 // pred_region
      %1037 = vsyncadd [#allocation3], 0
      %s1039 = sshll.u32 [#allocation2], 4
      %s1040 = int_to_ptr.vmem [resolvable:$true] %s1039
      %s1041 = sshll.u32 %s3, 4
      %s1042 = int_to_ptr.hbm [resolvable:$true] %s1041
      %1044 = dma.vmem_to_hbm [thread:$0]  %s1040, 64, %s1042, [#allocation3]
    $region17: #{tpu_custom_call.1} parent=1 // pred_fallthru
      _
    // Predicated region
    $region18: #{tpu_custom_call.1} parent=1 // pred_check
      _
    $region19: #{tpu_custom_call.1} parent=1 // pred_check_branch
      %1046 = sbr.rel (0) target = $region21
    $region20: #{tpu_custom_call.1} parent=1 // pred_region
      %1048 = dma.done [#allocation3], 64
    $region21: #{tpu_custom_call.1} parent=1 // pred_fallthru
      _
    %1049 = vsyncpa [#allocation3], 1

</llo_original>
